<compile_context>
chip_gen: v5e
topology: v5e:2x2
jax: 0.10.0
libtpu: 0.0.40
codegen_flags: <defaults>
</compile_context>

<pallas_src>
import functools

import jax
import jax.numpy as jnp
from jax.experimental import pallas as pl
from jax.experimental.pallas import tpu as pltpu


# ----------------------------------------------------------------------------
# Fused post-encoder head (one grid step = block_b batch rows).
#   cls_ref   : (3, Bb, H)   CLS rows of the [all, kw, con] encoder passes
#   hs_*_ref  : (Bb, S, H)   last_hidden_state of the three passes
#   masks_ref : (Bb, 2, S)   row 0 = kw_mask / sum(kw_mask), row 1 = con / sum
#   wp_ref:(H,H) bp:(1,H)    pooler Linear (pre-transposed) + bias
#   wh:(H,128) bh:(1,128)    packed heads: cols 0..L-1 = classifier,
#                            col L = kw_con classifier, rest zero
#   out_ref   : (7*Bb, 128)  segment layout (all segments 8-aligned, Bb % 8==0):
#       [0Bb:1Bb) logits_all  [1Bb:2Bb) logits_kw  [2Bb:3Bb) logits_con
#       [3Bb:4Bb) all_kw      [4Bb:5Bb) sep_kw
#       [5Bb:6Bb) all_con     [6Bb:7Bb) sep_con
# ----------------------------------------------------------------------------
def _fused_head_kernel(cls_ref, hs_all_ref, hs_kw_ref, hs_con_ref, masks_ref,
                       wp_ref, bp_ref, wh_ref, bh_ref, out_ref):
    Bb = hs_all_ref.shape[0]
    H = wp_ref.shape[0]

    # --- pooler (Linear + Tanh) on the 3*Bb CLS rows: one MXU matmul ----------
    cls = cls_ref[...].reshape(3 * Bb, H)
    pooled = jnp.tanh(
        jnp.dot(cls, wp_ref[...], preferred_element_type=jnp.float32)
        + bp_ref[...]
    )                                                        # (3*Bb, H) f32
    # TODO(synk): dropout is stochastic in torch training mode; identity here.

    # --- masked sequence means as MXU contractions (masks pre-scaled) ---------
    masks = masks_ref[...]                                   # (Bb, 2, S)
    m_all = jnp.einsum('bms,bsh->bmh', masks, hs_all_ref[...],
                       preferred_element_type=jnp.float32)   # (Bb, 2, H)
    m_kw = jnp.einsum('bms,bsh->bmh', masks, hs_kw_ref[...],
                      preferred_element_type=jnp.float32)
    m_con = jnp.einsum('bms,bsh->bmh', masks, hs_con_ref[...],
                       preferred_element_type=jnp.float32)

    all_kw = m_all[:, 0, :]                                  # (Bb, H)
    all_con = m_all[:, 1, :]
    sep_kw = m_kw[:, 0, :]
    sep_con = m_con[:, 1, :]

    feats = jnp.concatenate([pooled, all_kw, sep_kw, all_con, sep_con], axis=0)

    # --- one lane-dense packed-head matmul, single full-block store -----------
    out_ref[...] = (
        jnp.dot(feats, wh_ref[...], preferred_element_type=jnp.float32)
        + bh_ref[...]
    )


def fused_head(cls3, hs_all, hs_kw, hs_con, masks_s, wp_t, bp, w_heads,
               b_heads, *, block_b):
    _, B_pad, H = cls3.shape
    S = hs_all.shape[1]
    assert block_b % 8 == 0 and B_pad % block_b == 0
    nb = B_pad // block_b

    # Explicit VMEM budget: double-buffered inputs/outputs + weights + headroom.
    itemsize = hs_all.dtype.itemsize
    blk_in = (3 * block_b * S * H + 3 * block_b * H + 2 * block_b * S) * itemsize
    blk_out = 7 * block_b * 128 * 4
    w_bytes = H * H * wp_t.dtype.itemsize + H * 4 + (H * 128 + 128) * 4
    budget = 2 * (blk_in + blk_out + w_bytes) + (4 << 20)
    vmem_limit = int(min(max(budget, 32 << 20), 64 << 20))   # v7x cap: 64 MiB

    return pl.pallas_call(
        _fused_head_kernel,
        out_shape=jax.ShapeDtypeStruct((nb * 7 * block_b, 128), jnp.float32),
        grid_spec=pltpu.PrefetchScalarGridSpec(
            num_scalar_prefetch=0,
            grid=(nb,),
            in_specs=[
                pl.BlockSpec((3, block_b, H), lambda i: (0, i, 0)),   # cls3
                pl.BlockSpec((block_b, S, H), lambda i: (i, 0, 0)),   # hs_all
                pl.BlockSpec((block_b, S, H), lambda i: (i, 0, 0)),   # hs_kw
                pl.BlockSpec((block_b, S, H), lambda i: (i, 0, 0)),   # hs_con
                pl.BlockSpec((block_b, 2, S), lambda i: (i, 0, 0)),   # masks
                pl.BlockSpec((H, H), lambda i: (0, 0)),               # wp_t
                pl.BlockSpec((1, H), lambda i: (0, 0)),               # bp
                pl.BlockSpec((H, 128), lambda i: (0, 0)),             # w_heads
                pl.BlockSpec((1, 128), lambda i: (0, 0)),             # b_heads
            ],
            out_specs=pl.BlockSpec((7 * block_b, 128), lambda i: (i, 0)),
        ),
        compiler_params=pltpu.CompilerParams(
            dimension_semantics=("parallel",),
            vmem_limit_bytes=vmem_limit,
        ),
    )(cls3, hs_all, hs_kw, hs_con, masks_s, wp_t, bp, w_heads, b_heads)


# ----------------------------------------------------------------------------
# One-time parameter packing (hoisted out of the per-step forward).
# ----------------------------------------------------------------------------
def pack_head_params(params, label_num, compute_dtype=jnp.bfloat16):
    H = params["wp_t"].shape[0]
    L = label_num
    assert L + 1 <= 128
    w_heads = jnp.zeros((H, 128), jnp.float32)
    w_heads = w_heads.at[:, :L].set(params["wc_t"])
    w_heads = w_heads.at[:, L:L + 1].set(params["wk_t"])
    b_heads = jnp.zeros((1, 128), jnp.float32)
    b_heads = b_heads.at[0, :L].set(params["bc"])
    b_heads = b_heads.at[0, L].set(params["bk"][0])
    return {
        "wp_t": params["wp_t"].astype(compute_dtype),
        "bp": params["bp"].reshape(1, H).astype(jnp.float32),
        "w_heads": w_heads,
        "b_heads": b_heads,
    }


# ----------------------------------------------------------------------------
# Plain-JAX glue: losses over tiny (B, L) tensors (L = label_num).
# ----------------------------------------------------------------------------
def _log_softmax(x):
    x = x - jnp.max(x, axis=-1, keepdims=True)
    return x - jnp.log(jnp.sum(jnp.exp(x), axis=-1, keepdims=True))


def model_forward(hs_all, hs_kw, hs_con, kw_mask, con_mask, labels, packed,
                  label_num, *, block_b=8, compute_dtype=jnp.bfloat16):
    B, S, H = hs_all.shape
    L = label_num

    # --- pre-scaled lane-dense masks: mean = sum(hs * mask / sum(mask)) -------
    kw_f = kw_mask.astype(jnp.float32)
    con_f = con_mask.astype(jnp.float32)
    kw_den = jnp.sum(kw_f, axis=-1, keepdims=True)
    con_den = jnp.sum(con_f, axis=-1, keepdims=True)
    # where() keeps padded / empty-mask rows finite (torch ref would emit NaN).
    kw_s = jnp.where(kw_den > 0, kw_f / kw_den, 0.0)
    con_s = jnp.where(con_den > 0, con_f / con_den, 0.0)
    masks_s = jnp.stack([kw_s, con_s], axis=1)               # (B, 2, S)

    # --- compute-dtype hidden-state streams + gathered CLS rows ---------------
    # TODO(synk): at production sizes the encoder should emit compute_dtype
    # directly so this cast does not round-trip the hidden states through HBM.
    hs_all_c = hs_all.astype(compute_dtype)
    hs_kw_c = hs_kw.astype(compute_dtype)
    hs_con_c = hs_con.astype(compute_dtype)
    cls3 = jnp.stack(
        [hs_all_c[:, 0, :], hs_kw_c[:, 0, :], hs_con_c[:, 0, :]], axis=0)

    # --- pad batch to a multiple of block_b so every segment is 8-aligned -----
    B_pad = ((B + block_b - 1) // block_b) * block_b
    pad = B_pad - B
    if pad:
        hs_all_c = jnp.pad(hs_all_c, ((0, pad), (0, 0), (0, 0)))
        hs_kw_c = jnp.pad(hs_kw_c, ((0, pad), (0, 0), (0, 0)))
        hs_con_c = jnp.pad(hs_con_c, ((0, pad), (0, 0), (0, 0)))
        cls3 = jnp.pad(cls3, ((0, 0), (0, pad), (0, 0)))
        masks_s = jnp.pad(masks_s, ((0, pad), (0, 0), (0, 0)))
    masks_s = masks_s.astype(compute_dtype)

    # --- single fused, batch-gridded kernel ------------------------------------
    out = fused_head(cls3, hs_all_c, hs_kw_c, hs_con_c, masks_s,
                     packed["wp_t"], packed["bp"], packed["w_heads"],
                     packed["b_heads"], block_b=block_b)

    nb = B_pad // block_b
    out_r = out.reshape(nb, 7, block_b, 128)
    seg = lambda k: out_r[:, k].reshape(B_pad, 128)[:B]
    logits_all = seg(0)[:, :L]
    logits_kw = seg(1)[:, :L]
    logits_con = seg(2)[:, :L]
    kw_con_logits = jnp.concatenate(                         # all_kw, sep_kw, all_con, sep_con
        [seg(3)[:, L], seg(4)[:, L], seg(5)[:, L], seg(6)[:, L]], axis=0)
    kw_con_labels = jnp.concatenate(
        [jnp.ones((2 * B,), jnp.float32), jnp.zeros((2 * B,), jnp.float32)])

    # --- log-probabilities and joint-probability construction ---
    prob_all = _log_softmax(logits_all)
    prob_kw = _log_softmax(logits_kw)
    prob_con = _log_softmax(logits_con)
    prob_joint = prob_kw[:, :, None] + prob_con[:, None, :]  # (B, L, L)
    ej = jnp.exp(prob_joint)

    # tails[:, idx] = sum_{i>=idx, j>=idx} ej ; cols[idx] = tails[idx]-tails[idx+1]
    rc = jnp.flip(
        jnp.cumsum(jnp.cumsum(jnp.flip(ej, axis=(1, 2)), axis=1), axis=2),
        axis=(1, 2))
    tails = jnp.diagonal(rc, axis1=1, axis2=2)               # (B, L)
    tails_next = jnp.concatenate(
        [tails[:, 1:], jnp.zeros((B, 1), jnp.float32)], axis=1)
    cols = jnp.maximum(tails - tails_next, 0.0)              # clamp fp cancellation
    prob_kw_con = jnp.log(cols + 1e-20)

    # --- losses ---
    cls_loss = -jnp.mean(jnp.take_along_axis(prob_all, labels[:, None], axis=1))

    z = kw_con_logits.reshape(-1)
    y = kw_con_labels
    kw_con_loss = jnp.mean(
        jnp.maximum(z, 0.0) - z * y + jnp.log1p(jnp.exp(-jnp.abs(z)))
    )

    kl_ab = jnp.sum(jnp.exp(prob_all) * (prob_all - prob_kw_con)) / B
    kl_ba = jnp.sum(jnp.exp(prob_kw_con) * (prob_kw_con - prob_all)) / B
    kl_loss = 0.5 * (kl_ab + kl_ba)

    loss = cls_loss + kw_con_loss + kl_loss                  # loss_type == 1
    return {
        "loss": loss,
        "logits": logits_all,
        "kw_logits": logits_kw,
        "con_logits": logits_con,
    }


# ----------------------------------------------------------------------------
if __name__ == "__main__":
    B, S, H, L = 2, 16, 128, 4          # batch, seq, hidden_size, label_num
    key = jax.random.PRNGKey(0)
    keys = jax.random.split(key, 8)
    std = 0.02                          # config.initializer_range

    # Deterministic parameter init (Linear weights ~ N(0, 0.02), biases zero),
    # stored pre-transposed so the kernel computes x @ W^T + b.
    params = {
        "wp_t": (jax.random.normal(keys[0], (H, H)) * std).astype(jnp.float32),  # pooler
        "bp": jnp.zeros((H,), jnp.float32),
        "wc_t": (jax.random.normal(keys[1], (H, L)) * std).astype(jnp.float32),  # classifier
        "bc": jnp.zeros((L,), jnp.float32),
        "wk_t": (jax.random.normal(keys[2], (H, 1)) * std).astype(jnp.float32),  # kw_con_classifier
        "bk": jnp.zeros((1,), jnp.float32),
    }
    packed = pack_head_params(params, L)                     # one-time packing

    # TODO(synk): the pretrained AutoModel encoder is not translatable; its three
    # last_hidden_state outputs are generated deterministically as stand-ins.
    hs_all = jax.random.normal(keys[3], (B, S, H), jnp.float32)
    hs_kw = jax.random.normal(keys[4], (B, S, H), jnp.float32)
    hs_con = jax.random.normal(keys[5], (B, S, H), jnp.float32)

    # Masks (non-overlapping keyword / context / special positions).
    special_mask = jnp.zeros((B, S), jnp.int32).at[:, 0].set(1).at[:, S - 1].set(1)
    keyword_mask = jnp.zeros((B, S), jnp.int32).at[:, 1:5].set(1)
    context_mask = jnp.zeros((B, S), jnp.int32).at[:, 5:12].set(1)
    kw_mask = keyword_mask + special_mask
    con_mask = context_mask + special_mask

    labels = jax.random.randint(keys[6], (B,), 0, L, jnp.int32)

    fwd = jax.jit(functools.partial(model_forward, label_num=L))
    out = fwd(hs_all, hs_kw, hs_con, kw_mask, con_mask, labels, packed)
    jax.block_until_ready(out["loss"])
    jax.block_until_ready(out["logits"])
    print("KERNEL_OK")
</pallas_src>

<mosaic_0001>
module attributes {stable_mosaic.version = 11 : i64} {
  func.func @_fused_head_kernel(%arg0: i32, %arg1: memref<3x8x128xbf16, #tpu.memory_space<vmem>>, %arg2: memref<8x16x128xbf16, #tpu.memory_space<vmem>>, %arg3: memref<8x16x128xbf16, #tpu.memory_space<vmem>>, %arg4: memref<8x16x128xbf16, #tpu.memory_space<vmem>>, %arg5: memref<8x2x16xbf16, #tpu.memory_space<vmem>>, %arg6: memref<128x128xbf16, #tpu.memory_space<vmem>>, %arg7: memref<1x128xf32, #tpu.memory_space<vmem>>, %arg8: memref<128x128xf32, #tpu.memory_space<vmem>>, %arg9: memref<1x128xf32, #tpu.memory_space<vmem>>, %arg10: memref<56x128xf32, #tpu.memory_space<vmem>>) attributes {dimension_semantics = [#tpu.dimension_semantics<parallel>], iteration_bounds = array<i64: 1>, scalar_prefetch = 0 : i64, scratch_operands = 0 : i64, tpu.core_type = #tpu.core_type<tc>, window_params = [{transform_indices = @transform_0, window_bounds = array<i64: 3, 8, 128>}, {transform_indices = @transform_1, window_bounds = array<i64: 8, 16, 128>}, {transform_indices = @transform_2, window_bounds = array<i64: 8, 16, 128>}, {transform_indices = @transform_3, window_bounds = array<i64: 8, 16, 128>}, {transform_indices = @transform_4, window_bounds = array<i64: 8, 2, 16>}, {pipeline_mode = #tpu.pipeline_mode<synchronous>, transform_indices = @transform_5, window_bounds = array<i64: 128, 128>}, {pipeline_mode = #tpu.pipeline_mode<synchronous>, transform_indices = @transform_6, window_bounds = array<i64: 1, 128>}, {pipeline_mode = #tpu.pipeline_mode<synchronous>, transform_indices = @transform_7, window_bounds = array<i64: 128, 128>}, {pipeline_mode = #tpu.pipeline_mode<synchronous>, transform_indices = @transform_8, window_bounds = array<i64: 1, 128>}, {transform_indices = @transform_9, window_bounds = array<i64: 56, 128>}]} {
    %c0 = arith.constant 0 : index
    %c0_0 = arith.constant 0 : index
    %c0_1 = arith.constant 0 : index
    %0 = vector.load %arg1[%c0, %c0_0, %c0_1] : memref<3x8x128xbf16, #tpu.memory_space<vmem>>, vector<3x8x128xbf16>
    %1 = vector.shape_cast %0 : vector<3x8x128xbf16> to vector<24x128xbf16>
    %c0_2 = arith.constant 0 : index
    %c0_3 = arith.constant 0 : index
    %2 = vector.load %arg6[%c0_2, %c0_3] : memref<128x128xbf16, #tpu.memory_space<vmem>>, vector<128x128xbf16>
    %cst = arith.constant dense<0.000000e+00> : vector<24x128xf32>
    %3 = tpu.matmul %1, %2, %cst {dimension_numbers = #tpu.dot_dimension_numbers<[1], [0], [0], [1], [0, 0, 1, 1], [], []>} : vector<24x128xbf16>, vector<128x128xbf16>, vector<24x128xf32> -> vector<24x128xf32>
    %c0_4 = arith.constant 0 : index
    %c0_5 = arith.constant 0 : index
    %4 = vector.load %arg7[%c0_4, %c0_5] : memref<1x128xf32, #tpu.memory_space<vmem>>, vector<1x128xf32>
    %5 = vector.broadcast %4 : vector<1x128xf32> to vector<24x128xf32>
    %6 = arith.addf %3, %5 : vector<24x128xf32>
    %7 = math.tanh %6 : vector<24x128xf32>
    %c0_6 = arith.constant 0 : index
    %c0_7 = arith.constant 0 : index
    %c0_8 = arith.constant 0 : index
    %8 = vector.load %arg5[%c0_6, %c0_7, %c0_8] : memref<8x2x16xbf16, #tpu.memory_space<vmem>>, vector<8x2x16xbf16>
    %c0_9 = arith.constant 0 : index
    %c0_10 = arith.constant 0 : index
    %c0_11 = arith.constant 0 : index
    %9 = vector.load %arg2[%c0_9, %c0_10, %c0_11] : memref<8x16x128xbf16, #tpu.memory_space<vmem>>, vector<8x16x128xbf16>
    "tpu.trace_start"() <{level = 10 : i32, message = "bms,bsh->bmh"}> : () -> ()
    %cst_12 = arith.constant dense<0.000000e+00> : vector<8x2x128xf32>
    %10 = tpu.matmul %8, %9, %cst_12 {dimension_numbers = #tpu.dot_dimension_numbers<[2], [1], [1], [2], [0, 0, 0, 1, 1, 2], [0], [0]>} : vector<8x2x16xbf16>, vector<8x16x128xbf16>, vector<8x2x128xf32> -> vector<8x2x128xf32>
    "tpu.trace_stop"() : () -> ()
    %c0_13 = arith.constant 0 : index
    %c0_14 = arith.constant 0 : index
    %c0_15 = arith.constant 0 : index
    %11 = vector.load %arg3[%c0_13, %c0_14, %c0_15] : memref<8x16x128xbf16, #tpu.memory_space<vmem>>, vector<8x16x128xbf16>
    "tpu.trace_start"() <{level = 10 : i32, message = "bms,bsh->bmh"}> : () -> ()
    %cst_16 = arith.constant dense<0.000000e+00> : vector<8x2x128xf32>
    %12 = tpu.matmul %8, %11, %cst_16 {dimension_numbers = #tpu.dot_dimension_numbers<[2], [1], [1], [2], [0, 0, 0, 1, 1, 2], [0], [0]>} : vector<8x2x16xbf16>, vector<8x16x128xbf16>, vector<8x2x128xf32> -> vector<8x2x128xf32>
    "tpu.trace_stop"() : () -> ()
    %c0_17 = arith.constant 0 : index
    %c0_18 = arith.constant 0 : index
    %c0_19 = arith.constant 0 : index
    %13 = vector.load %arg4[%c0_17, %c0_18, %c0_19] : memref<8x16x128xbf16, #tpu.memory_space<vmem>>, vector<8x16x128xbf16>
    "tpu.trace_start"() <{level = 10 : i32, message = "bms,bsh->bmh"}> : () -> ()
    %cst_20 = arith.constant dense<0.000000e+00> : vector<8x2x128xf32>
    %14 = tpu.matmul %8, %13, %cst_20 {dimension_numbers = #tpu.dot_dimension_numbers<[2], [1], [1], [2], [0, 0, 0, 1, 1, 2], [0], [0]>} : vector<8x2x16xbf16>, vector<8x16x128xbf16>, vector<8x2x128xf32> -> vector<8x2x128xf32>
    "tpu.trace_stop"() : () -> ()
    %15 = vector.extract_strided_slice %10 {offsets = [0, 0, 0], sizes = [8, 1, 128], strides = [1, 1, 1]} : vector<8x2x128xf32> to vector<8x1x128xf32>
    %16 = vector.shape_cast %15 : vector<8x1x128xf32> to vector<8x128xf32>
    %17 = vector.extract_strided_slice %10 {offsets = [0, 1, 0], sizes = [8, 1, 128], strides = [1, 1, 1]} : vector<8x2x128xf32> to vector<8x1x128xf32>
    %18 = vector.shape_cast %17 : vector<8x1x128xf32> to vector<8x128xf32>
    %19 = vector.extract_strided_slice %12 {offsets = [0, 0, 0], sizes = [8, 1, 128], strides = [1, 1, 1]} : vector<8x2x128xf32> to vector<8x1x128xf32>
    %20 = vector.shape_cast %19 : vector<8x1x128xf32> to vector<8x128xf32>
    %21 = vector.extract_strided_slice %14 {offsets = [0, 1, 0], sizes = [8, 1, 128], strides = [1, 1, 1]} : vector<8x2x128xf32> to vector<8x1x128xf32>
    %22 = vector.shape_cast %21 : vector<8x1x128xf32> to vector<8x128xf32>
    %23 = tpu.concatenate %7, %16, %20, %18, %22 in 0 : vector<24x128xf32>, vector<8x128xf32>, vector<8x128xf32>, vector<8x128xf32>, vector<8x128xf32> -> vector<56x128xf32>
    %c0_21 = arith.constant 0 : index
    %c0_22 = arith.constant 0 : index
    %24 = vector.load %arg8[%c0_21, %c0_22] : memref<128x128xf32, #tpu.memory_space<vmem>>, vector<128x128xf32>
    %cst_23 = arith.constant dense<0.000000e+00> : vector<56x128xf32>
    %25 = tpu.matmul %23, %24, %cst_23 {dimension_numbers = #tpu.dot_dimension_numbers<[1], [0], [0], [1], [0, 0, 1, 1], [], []>} : vector<56x128xf32>, vector<128x128xf32>, vector<56x128xf32> -> vector<56x128xf32>
    %c0_24 = arith.constant 0 : index
    %c0_25 = arith.constant 0 : index
    %26 = vector.load %arg9[%c0_24, %c0_25] : memref<1x128xf32, #tpu.memory_space<vmem>>, vector<1x128xf32>
    %27 = vector.broadcast %26 : vector<1x128xf32> to vector<56x128xf32>
    %28 = arith.addf %25, %27 : vector<56x128xf32>
    %c0_26 = arith.constant 0 : index
    %c0_27 = arith.constant 0 : index
    %29 = vector.load %arg10[%c0_26, %c0_27] : memref<56x128xf32, #tpu.memory_space<vmem>>, vector<56x128xf32>
    tpu.vector_store %arg10[%c0_26, %c0_27], %28 {strides = array<i32>} : memref<56x128xf32, #tpu.memory_space<vmem>>, vector<56x128xf32>,
    return
  }
  func.func @transform_0(%arg0: i32) -> (i32, i32, i32) {
    %c0_i32 = arith.constant 0 : i32
    %c0_i32_0 = arith.constant 0 : i32
    %c0_i32_1 = arith.constant 0 : i32
    return %c0_i32, %arg0, %c0_i32_0 : i32, i32, i32
  }
  func.func @transform_1(%arg0: i32) -> (i32, i32, i32) {
    %c0_i32 = arith.constant 0 : i32
    %c0_i32_0 = arith.constant 0 : i32
    %c0_i32_1 = arith.constant 0 : i32
    return %arg0, %c0_i32, %c0_i32_0 : i32, i32, i32
  }
  func.func @transform_2(%arg0: i32) -> (i32, i32, i32) {
    %c0_i32 = arith.constant 0 : i32
    %c0_i32_0 = arith.constant 0 : i32
    %c0_i32_1 = arith.constant 0 : i32
    return %arg0, %c0_i32, %c0_i32_0 : i32, i32, i32
  }
  func.func @transform_3(%arg0: i32) -> (i32, i32, i32) {
    %c0_i32 = arith.constant 0 : i32
    %c0_i32_0 = arith.constant 0 : i32
    %c0_i32_1 = arith.constant 0 : i32
    return %arg0, %c0_i32, %c0_i32_0 : i32, i32, i32
  }
  func.func @transform_4(%arg0: i32) -> (i32, i32, i32) {
    %c0_i32 = arith.constant 0 : i32
    %c0_i32_0 = arith.constant 0 : i32
    %c0_i32_1 = arith.constant 0 : i32
    return %arg0, %c0_i32, %c0_i32_0 : i32, i32, i32
  }
  func.func @transform_5(%arg0: i32) -> (i32, i32) {
    %c0_i32 = arith.constant 0 : i32
    %c0_i32_0 = arith.constant 0 : i32
    %c0_i32_1 = arith.constant 0 : i32
    return %c0_i32, %c0_i32_0 : i32, i32
  }
  func.func @transform_6(%arg0: i32) -> (i32, i32) {
    %c0_i32 = arith.constant 0 : i32
    %c0_i32_0 = arith.constant 0 : i32
    %c0_i32_1 = arith.constant 0 : i32
    return %c0_i32, %c0_i32_0 : i32, i32
  }
  func.func @transform_7(%arg0: i32) -> (i32, i32) {
    %c0_i32 = arith.constant 0 : i32
    %c0_i32_0 = arith.constant 0 : i32
    %c0_i32_1 = arith.constant 0 : i32
    return %c0_i32, %c0_i32_0 : i32, i32
  }
  func.func @transform_8(%arg0: i32) -> (i32, i32) {
    %c0_i32 = arith.constant 0 : i32
    %c0_i32_0 = arith.constant 0 : i32
    %c0_i32_1 = arith.constant 0 : i32
    return %c0_i32, %c0_i32_0 : i32, i32
  }
  func.func @transform_9(%arg0: i32) -> (i32, i32) {
    %c0_i32 = arith.constant 0 : i32
    %c0_i32_0 = arith.constant 0 : i32
    return %arg0, %c0_i32 : i32, i32
  }
}

</mosaic_0001>

<llo_original>
// kernel: model_forward.1
$region0: #{model_forward.1}
  #allocation0 [shape = 'u32[]', space=smem, size = 0x4, offset = 0x4, fixed_abs, tag = 'smem constant byte address 0x4 - core index']
  #allocation1 [shape = 'u32[72,128]{1,0:T(1,128)}', space=vmem, size = 0x9000, scoped, tag = 'internal scratch']
  %s0 = inlined_call_operand.vmem [shape: bf16[3,8,128], index: 0, kind: input, shape index: {}]
  %s1 = inlined_call_operand.vmem [shape: bf16[8,16,128], index: 1, kind: input, shape index: {}]
  %s2 = inlined_call_operand.vmem [shape: bf16[8,16,128], index: 2, kind: input, shape index: {}]
  %s3 = inlined_call_operand.vmem [shape: bf16[8,16,128], index: 3, kind: input, shape index: {}]
  %s4 = inlined_call_operand.vmem [shape: bf16[8,2,16], index: 4, kind: input, shape index: {}]
  %s5 = inlined_call_operand.vmem [shape: bf16[128,128], index: 5, kind: input, shape index: {}]
  %s6 = inlined_call_operand.vmem [shape: f32[1,128], index: 6, kind: input, shape index: {}]
  %s7 = inlined_call_operand.vmem [shape: f32[128,128], index: 7, kind: input, shape index: {}]
  %s8 = inlined_call_operand.vmem [shape: f32[1,128], index: 8, kind: input, shape index: {}]
  %s9 = inlined_call_operand.vmem [shape: f32[56,128], index: 9, kind: output, shape index: {}]
  %s10 = sld [smem:[#allocation0]]
  $region46: #{model_forward.1} parent=0
    _
  %s12 = ssub.s32 1, %s10
  %s13 = scalar_select 0, %s12, %s10
  // Predicated region
  $region2: #{model_forward.1} parent=0 // pred_check
    _
  $region3: #{model_forward.1} parent=0 // pred_check_branch
    %15 = sbr.rel (0) target = $region5
  $region4: #{model_forward.1} parent=0 // pred_region
    _
  $region5: #{model_forward.1} parent=0 // pred_fallthru
    _
  // Predicated region
  $region6: #{model_forward.1} parent=0 // pred_check
    _
  $region7: #{model_forward.1} parent=0 // pred_check_branch
    %17 = sbr.rel (0) target = $region9
  $region8: #{model_forward.1} parent=0 // pred_region
    _
  $region9: #{model_forward.1} parent=0 // pred_fallthru
    _
  // Predicated region
  $region10: #{model_forward.1} parent=0 // pred_check
    _
  $region11: #{model_forward.1} parent=0 // pred_check_branch
    %19 = sbr.rel (0) target = $region13
  $region12: #{model_forward.1} parent=0 // pred_region
    _
  $region13: #{model_forward.1} parent=0 // pred_fallthru
    _
  // Predicated region
  $region14: #{model_forward.1} parent=0 // pred_check
    _
  $region15: #{model_forward.1} parent=0 // pred_check_branch
    %21 = sbr.rel (0) target = $region17
  $region16: #{model_forward.1} parent=0 // pred_region
    _
  $region17: #{model_forward.1} parent=0 // pred_fallthru
    _
  // Predicated region
  $region18: #{model_forward.1} parent=0 // pred_check
    _
  $region19: #{model_forward.1} parent=0 // pred_check_branch
    %23 = sbr.rel (0) target = $region21
  $region20: #{model_forward.1} parent=0 // pred_region
    _
  $region21: #{model_forward.1} parent=0 // pred_fallthru
    _
  // Predicated region
  $region22: #{model_forward.1} parent=0 // pred_check
    _
  $region23: #{model_forward.1} parent=0 // pred_check_branch
    %25 = sbr.rel (0) target = $region25
  $region24: #{model_forward.1} parent=0 // pred_region
    _
  $region25: #{model_forward.1} parent=0 // pred_fallthru
    _
  // Predicated region
  $region26: #{model_forward.1} parent=0 // pred_check
    _
  $region27: #{model_forward.1} parent=0 // pred_check_branch
    %27 = sbr.rel (0) target = $region29
  $region28: #{model_forward.1} parent=0 // pred_region
    _
  $region29: #{model_forward.1} parent=0 // pred_fallthru
    _
  // Predicated region
  $region30: #{model_forward.1} parent=0 // pred_check
    _
  $region31: #{model_forward.1} parent=0 // pred_check_branch
    %29 = sbr.rel (0) target = $region33
  $region32: #{model_forward.1} parent=0 // pred_region
    _
  $region33: #{model_forward.1} parent=0 // pred_fallthru
    _
  // Predicated region
  $region34: #{model_forward.1} parent=0 // pred_check
    _
  $region35: #{model_forward.1} parent=0 // pred_check_branch
    %31 = sbr.rel (0) target = $region37
  $region36: #{model_forward.1} parent=0 // pred_region
    _
  $region37: #{model_forward.1} parent=0 // pred_fallthru
    _
  %v33 = vld [vmem:[%s0] sm:$0xf]
  %v34 = vld [vmem:[%s0 + $0x4] sm:$0xf]
  %v35 = vld [vmem:[%s0 + $0x8] sm:$0xf]
  %v36 = vld [vmem:[%s5] sm:$0xf]
  %v37 = vld [vmem:[%s5 + $0x4] sm:$0xf]
  %v38 = vld [vmem:[%s5 + $0x8] sm:$0xf]
  %v39 = vld [vmem:[%s5 + $0xc] sm:$0xf]
  %v40 = vld [vmem:[%s5 + $0x10] sm:$0xf]
  %v41 = vld [vmem:[%s5 + $0x14] sm:$0xf]
  %v42 = vld [vmem:[%s5 + $0x18] sm:$0xf]
  %v43 = vld [vmem:[%s5 + $0x1c] sm:$0xf]
  %v44 = vld [vmem:[%s5 + $0x20] sm:$0xf]
  %v45 = vld [vmem:[%s5 + $0x24] sm:$0xf]
  %v46 = vld [vmem:[%s5 + $0x28] sm:$0xf]
  %v47 = vld [vmem:[%s5 + $0x2c] sm:$0xf]
  %v48 = vld [vmem:[%s5 + $0x30] sm:$0xf]
  %v49 = vld [vmem:[%s5 + $0x34] sm:$0xf]
  %v50 = vld [vmem:[%s5 + $0x38] sm:$0xf]
  %v51 = vld [vmem:[%s5 + $0x3c] sm:$0xf]
  %v52 = vld [vmem:[%s6] sm:$0x1]
  %v54 = vperm.slane %v52, 0
  %v59 = vunpack.c.l.b16 %v33
  %v60 = vunpack.c.l.b16 %v34
  %v61 = vunpack.c.l.b16 %v35
  %v62 = vpack.c.b16 %v60, %v59
  %v63 = vpack.c.b16 %v61, %v61
  %v82 = vunpack.c.l.b16 %v36
  %v83 = vunpack.c.l.b16 %v37
  %v84 = vunpack.c.l.b16 %v38
  %v85 = vunpack.c.l.b16 %v39
  %v86 = vunpack.c.l.b16 %v40
  %v87 = vunpack.c.l.b16 %v41
  %v88 = vunpack.c.l.b16 %v42
  %v89 = vunpack.c.l.b16 %v43
  %v90 = vunpack.c.l.b16 %v44
  %v91 = vunpack.c.l.b16 %v45
  %v92 = vunpack.c.l.b16 %v46
  %v93 = vunpack.c.l.b16 %v47
  %v94 = vunpack.c.l.b16 %v48
  %v95 = vunpack.c.l.b16 %v49
  %v96 = vunpack.c.l.b16 %v50
  %v97 = vunpack.c.l.b16 %v51
  %v98 = vpack.c.b16 %v83, %v82
  %v99 = vpack.c.b16 %v85, %v84
  %v100 = vpack.c.b16 %v87, %v86
  %v101 = vpack.c.b16 %v89, %v88
  %v102 = vpack.c.b16 %v91, %v90
  %v103 = vpack.c.b16 %v93, %v92
  %v104 = vpack.c.b16 %v95, %v94
  %v105 = vpack.c.b16 %v97, %v96
  %114 = vmatpush.bf16.msra.mxu0 %v105
  %115 = vmatpush.bf16.msra.mxu0 %v104
  %116 = vmatpush.bf16.msra.mxu0 %v103
  %117 = vmatpush.bf16.msra.mxu0 %v102
  %118 = vmatpush.bf16.msra.mxu0 %v101
  %119 = vmatpush.bf16.msra.mxu0 %v100
  %120 = vmatpush.bf16.msra.mxu0 %v99
  %121 = vmatpush.bf16.msra.mxu0 %v98
  %122 = vmatmul.bf16.gmra.mxu0 %v62
  %v123 = vpop.f32.mrf.mxu0
  %v124 = vadd.f32 %v54, %v123
  %v125 = vpop.f32.mrf.mxu0
  %v126 = vadd.f32 %v54, %v125
  %127 = vmatmul.bf16.gmra.mxu0 %v63
  %v128 = vpop.f32.mrf.mxu0
  %v129 = vadd.f32 %v54, %v128
  %v130 = vpop.f32.mrf.mxu0
  %131 = vdwg.mxu0
  %v132 = vtanh.pop %v124
  %v133 = vtanh.pop %v126
  %v134 = vtanh.pop %v129
  %v135 = vld [vmem:[%s4] sm:$0x1]
  %v136 = vld [vmem:[%s4 + $0x1] sm:$0x1]
  %v137 = vld [vmem:[%s4 + $0x2] sm:$0x1]
  %v138 = vld [vmem:[%s4 + $0x3] sm:$0x1]
  %v139 = vld [vmem:[%s4 + $0x4] sm:$0x1]
  %v140 = vld [vmem:[%s4 + $0x5] sm:$0x1]
  %v141 = vld [vmem:[%s4 + $0x6] sm:$0x1]
  %v142 = vld [vmem:[%s4 + $0x7] sm:$0x1]
  %v143 = vld [vmem:[%s1] sm:$0xf]
  %v144 = vld [vmem:[%s1 + $0x4] sm:$0xf]
  %v145 = vld [vmem:[%s1 + $0x8] sm:$0xf]
  %v146 = vld [vmem:[%s1 + $0xc] sm:$0xf]
  %v147 = vld [vmem:[%s1 + $0x10] sm:$0xf]
  %v148 = vld [vmem:[%s1 + $0x14] sm:$0xf]
  %v149 = vld [vmem:[%s1 + $0x18] sm:$0xf]
  %v150 = vld [vmem:[%s1 + $0x1c] sm:$0xf]
  %v151 = vld [vmem:[%s1 + $0x20] sm:$0xf]
  %v152 = vld [vmem:[%s1 + $0x24] sm:$0xf]
  %v153 = vld [vmem:[%s1 + $0x28] sm:$0xf]
  %v154 = vld [vmem:[%s1 + $0x2c] sm:$0xf]
  %v155 = vld [vmem:[%s1 + $0x30] sm:$0xf]
  %v156 = vld [vmem:[%s1 + $0x34] sm:$0xf]
  %v157 = vld [vmem:[%s1 + $0x38] sm:$0xf]
  %v158 = vld [vmem:[%s1 + $0x3c] sm:$0xf]
  %v161 = vunpack.c.l.b16 %v143
  %v162 = vunpack.c.l.b16 %v144
  %v163 = vpack.c.b16 %v162, %v161
  %vm165 = vcmask 130048
  %v167 = vsel %vm165, %v135, 0
  %169 = vmatpush.bf16.msra.mxu0 0
  %170 = vmatpush.bf16.msra.mxu0 0
  %171 = vmatpush.bf16.msra.mxu0 0
  %172 = vmatpush.bf16.msra.mxu0 0
  %173 = vmatpush.bf16.msra.mxu0 0
  %174 = vmatpush.bf16.msra.mxu0 0
  %175 = vmatpush.bf16.msra.mxu0 0
  %176 = vmatpush.bf16.msra.mxu0 %v163
  %177 = vmatmul.bf16.gmra.mxu0 %v167
  %v178 = vpop.f32.mrf.mxu0
  %v179 = vadd.f32 0.0, %v178
  %v180 = vpop.f32.mrf.mxu0
  %181 = vdwg.mxu0
  %v184 = vunpack.c.l.b16 %v145
  %v185 = vunpack.c.l.b16 %v146
  %v186 = vpack.c.b16 %v185, %v184
  %v189 = vsel %vm165, %v136, 0
  %191 = vmatpush.bf16.msra.mxu0 0
  %192 = vmatpush.bf16.msra.mxu0 0
  %193 = vmatpush.bf16.msra.mxu0 0
  %194 = vmatpush.bf16.msra.mxu0 0
  %195 = vmatpush.bf16.msra.mxu0 0
  %196 = vmatpush.bf16.msra.mxu0 0
  %197 = vmatpush.bf16.msra.mxu0 0
  %198 = vmatpush.bf16.msra.mxu0 %v186
  %199 = vmatmul.bf16.gmra.mxu0 %v189
  %v200 = vpop.f32.mrf.mxu0
  %v201 = vadd.f32 0.0, %v200
  %v202 = vpop.f32.mrf.mxu0
  %203 = vdwg.mxu0
  %v206 = vunpack.c.l.b16 %v147
  %v207 = vunpack.c.l.b16 %v148
  %v208 = vpack.c.b16 %v207, %v206
  %v211 = vsel %vm165, %v137, 0
  %213 = vmatpush.bf16.msra.mxu0 0
  %214 = vmatpush.bf16.msra.mxu0 0
  %215 = vmatpush.bf16.msra.mxu0 0
  %216 = vmatpush.bf16.msra.mxu0 0
  %217 = vmatpush.bf16.msra.mxu0 0
  %218 = vmatpush.bf16.msra.mxu0 0
  %219 = vmatpush.bf16.msra.mxu0 0
  %220 = vmatpush.bf16.msra.mxu0 %v208
  %221 = vmatmul.bf16.gmra.mxu0 %v211
  %v222 = vpop.f32.mrf.mxu0
  %v223 = vadd.f32 0.0, %v222
  %v224 = vpop.f32.mrf.mxu0
  %225 = vdwg.mxu0
  %v228 = vunpack.c.l.b16 %v149
  %v229 = vunpack.c.l.b16 %v150
  %v230 = vpack.c.b16 %v229, %v228
  %v233 = vsel %vm165, %v138, 0
  %235 = vmatpush.bf16.msra.mxu0 0
  %236 = vmatpush.bf16.msra.mxu0 0
  %237 = vmatpush.bf16.msra.mxu0 0
  %238 = vmatpush.bf16.msra.mxu0 0
  %239 = vmatpush.bf16.msra.mxu0 0
  %240 = vmatpush.bf16.msra.mxu0 0
  %241 = vmatpush.bf16.msra.mxu0 0
  %242 = vmatpush.bf16.msra.mxu0 %v230
  %243 = vmatmul.bf16.gmra.mxu0 %v233
  %v244 = vpop.f32.mrf.mxu0
  %v245 = vadd.f32 0.0, %v244
  %v246 = vpop.f32.mrf.mxu0
  %247 = vdwg.mxu0
  %v250 = vunpack.c.l.b16 %v151
  %v251 = vunpack.c.l.b16 %v152
  %v252 = vpack.c.b16 %v251, %v250
  %v255 = vsel %vm165, %v139, 0
  %257 = vmatpush.bf16.msra.mxu0 0
  %258 = vmatpush.bf16.msra.mxu0 0
  %259 = vmatpush.bf16.msra.mxu0 0
  %260 = vmatpush.bf16.msra.mxu0 0
  %261 = vmatpush.bf16.msra.mxu0 0
  %262 = vmatpush.bf16.msra.mxu0 0
  %263 = vmatpush.bf16.msra.mxu0 0
  %264 = vmatpush.bf16.msra.mxu0 %v252
  %265 = vmatmul.bf16.gmra.mxu0 %v255
  %v266 = vpop.f32.mrf.mxu0
  %v267 = vadd.f32 0.0, %v266
  %v268 = vpop.f32.mrf.mxu0
  %269 = vdwg.mxu0
  %v272 = vunpack.c.l.b16 %v153
  %v273 = vunpack.c.l.b16 %v154
  %v274 = vpack.c.b16 %v273, %v272
  %v277 = vsel %vm165, %v140, 0
  %279 = vmatpush.bf16.msra.mxu0 0
  %280 = vmatpush.bf16.msra.mxu0 0
  %281 = vmatpush.bf16.msra.mxu0 0
  %282 = vmatpush.bf16.msra.mxu0 0
  %283 = vmatpush.bf16.msra.mxu0 0
  %284 = vmatpush.bf16.msra.mxu0 0
  %285 = vmatpush.bf16.msra.mxu0 0
  %286 = vmatpush.bf16.msra.mxu0 %v274
  %287 = vmatmul.bf16.gmra.mxu0 %v277
  %v288 = vpop.f32.mrf.mxu0
  %v289 = vadd.f32 0.0, %v288
  %v290 = vpop.f32.mrf.mxu0
  %291 = vdwg.mxu0
  %v294 = vunpack.c.l.b16 %v155
  %v295 = vunpack.c.l.b16 %v156
  %v296 = vpack.c.b16 %v295, %v294
  %v299 = vsel %vm165, %v141, 0
  %301 = vmatpush.bf16.msra.mxu0 0
  %302 = vmatpush.bf16.msra.mxu0 0
  %303 = vmatpush.bf16.msra.mxu0 0
  %304 = vmatpush.bf16.msra.mxu0 0
  %305 = vmatpush.bf16.msra.mxu0 0
  %306 = vmatpush.bf16.msra.mxu0 0
  %307 = vmatpush.bf16.msra.mxu0 0
  %308 = vmatpush.bf16.msra.mxu0 %v296
  %309 = vmatmul.bf16.gmra.mxu0 %v299
  %v310 = vpop.f32.mrf.mxu0
  %v311 = vadd.f32 0.0, %v310
  %v312 = vpop.f32.mrf.mxu0
  %313 = vdwg.mxu0
  %v316 = vunpack.c.l.b16 %v157
  %v317 = vunpack.c.l.b16 %v158
  %v318 = vpack.c.b16 %v317, %v316
  %v321 = vsel %vm165, %v142, 0
  %323 = vmatpush.bf16.msra.mxu0 0
  %324 = vmatpush.bf16.msra.mxu0 0
  %325 = vmatpush.bf16.msra.mxu0 0
  %326 = vmatpush.bf16.msra.mxu0 0
  %327 = vmatpush.bf16.msra.mxu0 0
  %328 = vmatpush.bf16.msra.mxu0 0
  %329 = vmatpush.bf16.msra.mxu0 0
  %330 = vmatpush.bf16.msra.mxu0 %v318
  %331 = vmatmul.bf16.gmra.mxu0 %v321
  %v332 = vpop.f32.mrf.mxu0
  %v333 = vadd.f32 0.0, %v332
  %v334 = vpop.f32.mrf.mxu0
  %335 = vdwg.mxu0
  %v336 = vld [vmem:[%s2] sm:$0xf]
  %v337 = vld [vmem:[%s2 + $0x4] sm:$0xf]
  %v338 = vld [vmem:[%s2 + $0x8] sm:$0xf]
  %v339 = vld [vmem:[%s2 + $0xc] sm:$0xf]
  %v340 = vld [vmem:[%s2 + $0x10] sm:$0xf]
  %v341 = vld [vmem:[%s2 + $0x14] sm:$0xf]
  %v342 = vld [vmem:[%s2 + $0x18] sm:$0xf]
  %v343 = vld [vmem:[%s2 + $0x1c] sm:$0xf]
  %v344 = vld [vmem:[%s2 + $0x20] sm:$0xf]
  %v345 = vld [vmem:[%s2 + $0x24] sm:$0xf]
  %v346 = vld [vmem:[%s2 + $0x28] sm:$0xf]
  %v347 = vld [vmem:[%s2 + $0x2c] sm:$0xf]
  %v348 = vld [vmem:[%s2 + $0x30] sm:$0xf]
  %v349 = vld [vmem:[%s2 + $0x34] sm:$0xf]
  %v350 = vld [vmem:[%s2 + $0x38] sm:$0xf]
  %v351 = vld [vmem:[%s2 + $0x3c] sm:$0xf]
  %v354 = vunpack.c.l.b16 %v336
  %v355 = vunpack.c.l.b16 %v337
  %v356 = vpack.c.b16 %v355, %v354
  %358 = vmatpush.bf16.msra.mxu0 0
  %359 = vmatpush.bf16.msra.mxu0 0
  %360 = vmatpush.bf16.msra.mxu0 0
  %361 = vmatpush.bf16.msra.mxu0 0
  %362 = vmatpush.bf16.msra.mxu0 0
  %363 = vmatpush.bf16.msra.mxu0 0
  %364 = vmatpush.bf16.msra.mxu0 0
  %365 = vmatpush.bf16.msra.mxu0 %v356
  %366 = vmatmul.bf16.gmra.mxu0 %v167
  %v367 = vpop.f32.mrf.mxu0
  %v368 = vadd.f32 0.0, %v367
  %v369 = vpop.f32.mrf.mxu0
  %370 = vdwg.mxu0
  %v373 = vunpack.c.l.b16 %v338
  %v374 = vunpack.c.l.b16 %v339
  %v375 = vpack.c.b16 %v374, %v373
  %377 = vmatpush.bf16.msra.mxu0 0
  %378 = vmatpush.bf16.msra.mxu0 0
  %379 = vmatpush.bf16.msra.mxu0 0
  %380 = vmatpush.bf16.msra.mxu0 0
  %381 = vmatpush.bf16.msra.mxu0 0
  %382 = vmatpush.bf16.msra.mxu0 0
  %383 = vmatpush.bf16.msra.mxu0 0
  %384 = vmatpush.bf16.msra.mxu0 %v375
  %385 = vmatmul.bf16.gmra.mxu0 %v189
  %v386 = vpop.f32.mrf.mxu0
  %v387 = vadd.f32 0.0, %v386
  %v388 = vpop.f32.mrf.mxu0
  %389 = vdwg.mxu0
  %v392 = vunpack.c.l.b16 %v340
  %v393 = vunpack.c.l.b16 %v341
  %v394 = vpack.c.b16 %v393, %v392
  %396 = vmatpush.bf16.msra.mxu0 0
  %397 = vmatpush.bf16.msra.mxu0 0
  %398 = vmatpush.bf16.msra.mxu0 0
  %399 = vmatpush.bf16.msra.mxu0 0
  %400 = vmatpush.bf16.msra.mxu0 0
  %401 = vmatpush.bf16.msra.mxu0 0
  %402 = vmatpush.bf16.msra.mxu0 0
  %403 = vmatpush.bf16.msra.mxu0 %v394
  %404 = vmatmul.bf16.gmra.mxu0 %v211
  %v405 = vpop.f32.mrf.mxu0
  %v406 = vadd.f32 0.0, %v405
  %v407 = vpop.f32.mrf.mxu0
  %408 = vdwg.mxu0
  %v411 = vunpack.c.l.b16 %v342
  %v412 = vunpack.c.l.b16 %v343
  %v413 = vpack.c.b16 %v412, %v411
  %415 = vmatpush.bf16.msra.mxu0 0
  %416 = vmatpush.bf16.msra.mxu0 0
  %417 = vmatpush.bf16.msra.mxu0 0
  %418 = vmatpush.bf16.msra.mxu0 0
  %419 = vmatpush.bf16.msra.mxu0 0
  %420 = vmatpush.bf16.msra.mxu0 0
  %421 = vmatpush.bf16.msra.mxu0 0
  %422 = vmatpush.bf16.msra.mxu0 %v413
  %423 = vmatmul.bf16.gmra.mxu0 %v233
  %v424 = vpop.f32.mrf.mxu0
  %v425 = vadd.f32 0.0, %v424
  %v426 = vpop.f32.mrf.mxu0
  %427 = vdwg.mxu0
  %v430 = vunpack.c.l.b16 %v344
  %v431 = vunpack.c.l.b16 %v345
  %v432 = vpack.c.b16 %v431, %v430
  %434 = vmatpush.bf16.msra.mxu0 0
  %435 = vmatpush.bf16.msra.mxu0 0
  %436 = vmatpush.bf16.msra.mxu0 0
  %437 = vmatpush.bf16.msra.mxu0 0
  %438 = vmatpush.bf16.msra.mxu0 0
  %439 = vmatpush.bf16.msra.mxu0 0
  %440 = vmatpush.bf16.msra.mxu0 0
  %441 = vmatpush.bf16.msra.mxu0 %v432
  %442 = vmatmul.bf16.gmra.mxu0 %v255
  %v443 = vpop.f32.mrf.mxu0
  %v444 = vadd.f32 0.0, %v443
  %v445 = vpop.f32.mrf.mxu0
  %446 = vdwg.mxu0
  %v449 = vunpack.c.l.b16 %v346
  %v450 = vunpack.c.l.b16 %v347
  %v451 = vpack.c.b16 %v450, %v449
  %453 = vmatpush.bf16.msra.mxu0 0
  %454 = vmatpush.bf16.msra.mxu0 0
  %455 = vmatpush.bf16.msra.mxu0 0
  %456 = vmatpush.bf16.msra.mxu0 0
  %457 = vmatpush.bf16.msra.mxu0 0
  %458 = vmatpush.bf16.msra.mxu0 0
  %459 = vmatpush.bf16.msra.mxu0 0
  %460 = vmatpush.bf16.msra.mxu0 %v451
  %461 = vmatmul.bf16.gmra.mxu0 %v277
  %v462 = vpop.f32.mrf.mxu0
  %v463 = vadd.f32 0.0, %v462
  %v464 = vpop.f32.mrf.mxu0
  %465 = vdwg.mxu0
  %v468 = vunpack.c.l.b16 %v348
  %v469 = vunpack.c.l.b16 %v349
  %v470 = vpack.c.b16 %v469, %v468
  %472 = vmatpush.bf16.msra.mxu0 0
  %473 = vmatpush.bf16.msra.mxu0 0
  %474 = vmatpush.bf16.msra.mxu0 0
  %475 = vmatpush.bf16.msra.mxu0 0
  %476 = vmatpush.bf16.msra.mxu0 0
  %477 = vmatpush.bf16.msra.mxu0 0
  %478 = vmatpush.bf16.msra.mxu0 0
  %479 = vmatpush.bf16.msra.mxu0 %v470
  %480 = vmatmul.bf16.gmra.mxu0 %v299
  %v481 = vpop.f32.mrf.mxu0
  %v482 = vadd.f32 0.0, %v481
  %v483 = vpop.f32.mrf.mxu0
  %484 = vdwg.mxu0
  %v487 = vunpack.c.l.b16 %v350
  %v488 = vunpack.c.l.b16 %v351
  %v489 = vpack.c.b16 %v488, %v487
  %491 = vmatpush.bf16.msra.mxu0 0
  %492 = vmatpush.bf16.msra.mxu0 0
  %493 = vmatpush.bf16.msra.mxu0 0
  %494 = vmatpush.bf16.msra.mxu0 0
  %495 = vmatpush.bf16.msra.mxu0 0
  %496 = vmatpush.bf16.msra.mxu0 0
  %497 = vmatpush.bf16.msra.mxu0 0
  %498 = vmatpush.bf16.msra.mxu0 %v489
  %499 = vmatmul.bf16.gmra.mxu0 %v321
  %v500 = vpop.f32.mrf.mxu0
  %v501 = vadd.f32 0.0, %v500
  %v502 = vpop.f32.mrf.mxu0
  %503 = vdwg.mxu0
  %v504 = vld [vmem:[%s3] sm:$0xf]
  %v505 = vld [vmem:[%s3 + $0x4] sm:$0xf]
  %v506 = vld [vmem:[%s3 + $0x8] sm:$0xf]
  %v507 = vld [vmem:[%s3 + $0xc] sm:$0xf]
  %v508 = vld [vmem:[%s3 + $0x10] sm:$0xf]
  %v509 = vld [vmem:[%s3 + $0x14] sm:$0xf]
  %v510 = vld [vmem:[%s3 + $0x18] sm:$0xf]
  %v511 = vld [vmem:[%s3 + $0x1c] sm:$0xf]
  %v512 = vld [vmem:[%s3 + $0x20] sm:$0xf]
  %v513 = vld [vmem:[%s3 + $0x24] sm:$0xf]
  %v514 = vld [vmem:[%s3 + $0x28] sm:$0xf]
  %v515 = vld [vmem:[%s3 + $0x2c] sm:$0xf]
  %v516 = vld [vmem:[%s3 + $0x30] sm:$0xf]
  %v517 = vld [vmem:[%s3 + $0x34] sm:$0xf]
  %v518 = vld [vmem:[%s3 + $0x38] sm:$0xf]
  %v519 = vld [vmem:[%s3 + $0x3c] sm:$0xf]
  %v522 = vunpack.c.l.b16 %v504
  %v523 = vunpack.c.l.b16 %v505
  %v524 = vpack.c.b16 %v523, %v522
  %526 = vmatpush.bf16.msra.mxu0 0
  %527 = vmatpush.bf16.msra.mxu0 0
  %528 = vmatpush.bf16.msra.mxu0 0
  %529 = vmatpush.bf16.msra.mxu0 0
  %530 = vmatpush.bf16.msra.mxu0 0
  %531 = vmatpush.bf16.msra.mxu0 0
  %532 = vmatpush.bf16.msra.mxu0 0
  %533 = vmatpush.bf16.msra.mxu0 %v524
  %534 = vmatmul.bf16.gmra.mxu0 %v167
  %v535 = vpop.f32.mrf.mxu0
  %v536 = vadd.f32 0.0, %v535
  %v537 = vpop.f32.mrf.mxu0
  %538 = vdwg.mxu0
  %v541 = vunpack.c.l.b16 %v506
  %v542 = vunpack.c.l.b16 %v507
  %v543 = vpack.c.b16 %v542, %v541
  %545 = vmatpush.bf16.msra.mxu0 0
  %546 = vmatpush.bf16.msra.mxu0 0
  %547 = vmatpush.bf16.msra.mxu0 0
  %548 = vmatpush.bf16.msra.mxu0 0
  %549 = vmatpush.bf16.msra.mxu0 0
  %550 = vmatpush.bf16.msra.mxu0 0
  %551 = vmatpush.bf16.msra.mxu0 0
  %552 = vmatpush.bf16.msra.mxu0 %v543
  %553 = vmatmul.bf16.gmra.mxu0 %v189
  %v554 = vpop.f32.mrf.mxu0
  %v555 = vadd.f32 0.0, %v554
  %v556 = vpop.f32.mrf.mxu0
  %557 = vdwg.mxu0
  %v560 = vunpack.c.l.b16 %v508
  %v561 = vunpack.c.l.b16 %v509
  %v562 = vpack.c.b16 %v561, %v560
  %564 = vmatpush.bf16.msra.mxu0 0
  %565 = vmatpush.bf16.msra.mxu0 0
  %566 = vmatpush.bf16.msra.mxu0 0
  %567 = vmatpush.bf16.msra.mxu0 0
  %568 = vmatpush.bf16.msra.mxu0 0
  %569 = vmatpush.bf16.msra.mxu0 0
  %570 = vmatpush.bf16.msra.mxu0 0
  %571 = vmatpush.bf16.msra.mxu0 %v562
  %572 = vmatmul.bf16.gmra.mxu0 %v211
  %v573 = vpop.f32.mrf.mxu0
  %v574 = vadd.f32 0.0, %v573
  %v575 = vpop.f32.mrf.mxu0
  %576 = vdwg.mxu0
  %v579 = vunpack.c.l.b16 %v510
  %v580 = vunpack.c.l.b16 %v511
  %v581 = vpack.c.b16 %v580, %v579
  %583 = vmatpush.bf16.msra.mxu0 0
  %584 = vmatpush.bf16.msra.mxu0 0
  %585 = vmatpush.bf16.msra.mxu0 0
  %586 = vmatpush.bf16.msra.mxu0 0
  %587 = vmatpush.bf16.msra.mxu0 0
  %588 = vmatpush.bf16.msra.mxu0 0
  %589 = vmatpush.bf16.msra.mxu0 0
  %590 = vmatpush.bf16.msra.mxu0 %v581
  %591 = vmatmul.bf16.gmra.mxu0 %v233
  %v592 = vpop.f32.mrf.mxu0
  %v593 = vadd.f32 0.0, %v592
  %v594 = vpop.f32.mrf.mxu0
  %595 = vdwg.mxu0
  %v598 = vunpack.c.l.b16 %v512
  %v599 = vunpack.c.l.b16 %v513
  %v600 = vpack.c.b16 %v599, %v598
  %602 = vmatpush.bf16.msra.mxu0 0
  %603 = vmatpush.bf16.msra.mxu0 0
  %604 = vmatpush.bf16.msra.mxu0 0
  %605 = vmatpush.bf16.msra.mxu0 0
  %606 = vmatpush.bf16.msra.mxu0 0
  %607 = vmatpush.bf16.msra.mxu0 0
  %608 = vmatpush.bf16.msra.mxu0 0
  %609 = vmatpush.bf16.msra.mxu0 %v600
  %610 = vmatmul.bf16.gmra.mxu0 %v255
  %v611 = vpop.f32.mrf.mxu0
  %v612 = vadd.f32 0.0, %v611
  %v613 = vpop.f32.mrf.mxu0
  %614 = vdwg.mxu0
  %v617 = vunpack.c.l.b16 %v514
  %v618 = vunpack.c.l.b16 %v515
  %v619 = vpack.c.b16 %v618, %v617
  %621 = vmatpush.bf16.msra.mxu0 0
  %622 = vmatpush.bf16.msra.mxu0 0
  %623 = vmatpush.bf16.msra.mxu0 0
  %624 = vmatpush.bf16.msra.mxu0 0
  %625 = vmatpush.bf16.msra.mxu0 0
  %626 = vmatpush.bf16.msra.mxu0 0
  %627 = vmatpush.bf16.msra.mxu0 0
  %628 = vmatpush.bf16.msra.mxu0 %v619
  %629 = vmatmul.bf16.gmra.mxu0 %v277
  %v630 = vpop.f32.mrf.mxu0
  %v631 = vadd.f32 0.0, %v630
  %v632 = vpop.f32.mrf.mxu0
  %633 = vdwg.mxu0
  %v636 = vunpack.c.l.b16 %v516
  %v637 = vunpack.c.l.b16 %v517
  %v638 = vpack.c.b16 %v637, %v636
  %640 = vmatpush.bf16.msra.mxu0 0
  %641 = vmatpush.bf16.msra.mxu0 0
  %642 = vmatpush.bf16.msra.mxu0 0
  %643 = vmatpush.bf16.msra.mxu0 0
  %644 = vmatpush.bf16.msra.mxu0 0
  %645 = vmatpush.bf16.msra.mxu0 0
  %646 = vmatpush.bf16.msra.mxu0 0
  %647 = vmatpush.bf16.msra.mxu0 %v638
  %648 = vmatmul.bf16.gmra.mxu0 %v299
  %v649 = vpop.f32.mrf.mxu0
  %v650 = vadd.f32 0.0, %v649
  %v651 = vpop.f32.mrf.mxu0
  %652 = vdwg.mxu0
  %v655 = vunpack.c.l.b16 %v518
  %v656 = vunpack.c.l.b16 %v519
  %v657 = vpack.c.b16 %v656, %v655
  %659 = vmatpush.bf16.msra.mxu0 0
  %660 = vmatpush.bf16.msra.mxu0 0
  %661 = vmatpush.bf16.msra.mxu0 0
  %662 = vmatpush.bf16.msra.mxu0 0
  %663 = vmatpush.bf16.msra.mxu0 0
  %664 = vmatpush.bf16.msra.mxu0 0
  %665 = vmatpush.bf16.msra.mxu0 0
  %666 = vmatpush.bf16.msra.mxu0 %v657
  %667 = vmatmul.bf16.gmra.mxu0 %v321
  %v668 = vpop.f32.mrf.mxu0
  %v669 = vadd.f32 0.0, %v668
  %v670 = vpop.f32.mrf.mxu0
  %671 = vdwg.mxu0
  %v680 = vrot.slane %v201, 7
  %vm681 = vcmask 1041409
  %v682 = vsel %vm681, %v680, %v179
  %v683 = vrot.slane %v223, 6
  %vm684 = vcmask 1042434
  %v685 = vsel %vm684, %v683, %v682
  %v686 = vrot.slane %v245, 5
  %vm687 = vcmask 1043459
  %v688 = vsel %vm687, %v686, %v685
  %v689 = vrot.slane %v267, 4
  %vm690 = vcmask 1044484
  %v691 = vsel %vm690, %v689, %v688
  %v692 = vrot.slane %v289, 3
  %vm693 = vcmask 1045509
  %v694 = vsel %vm693, %v692, %v691
  %v695 = vrot.slane %v311, 2
  %vm696 = vcmask 1046534
  %v697 = vsel %vm696, %v695, %v694
  %v698 = vrot.slane %v333, 1
  %vm699 = vcmask 1047559
  %v700 = vsel %vm699, %v698, %v697
  %v710 = vrot.slane %v387, 7
  %v711 = vsel %vm681, %v710, %v368
  %v712 = vrot.slane %v406, 6
  %v713 = vsel %vm684, %v712, %v711
  %v714 = vrot.slane %v425, 5
  %v715 = vsel %vm687, %v714, %v713
  %v716 = vrot.slane %v444, 4
  %v717 = vsel %vm690, %v716, %v715
  %v718 = vrot.slane %v463, 3
  %v719 = vsel %vm693, %v718, %v717
  %v720 = vrot.slane %v482, 2
  %v721 = vsel %vm696, %v720, %v719
  %v722 = vrot.slane %v501, 1
  %v723 = vsel %vm699, %v722, %v721
  %v725 = vrot.slane %v179, 1
  %v726 = vsel %vm681, %v201, %v725
  %v727 = vrot.slane %v223, 7
  %v728 = vsel %vm684, %v727, %v726
  %v729 = vrot.slane %v245, 6
  %v730 = vsel %vm687, %v729, %v728
  %v731 = vrot.slane %v267, 5
  %v732 = vsel %vm690, %v731, %v730
  %v733 = vrot.slane %v289, 4
  %v734 = vsel %vm693, %v733, %v732
  %v735 = vrot.slane %v311, 3
  %v736 = vsel %vm696, %v735, %v734
  %v737 = vrot.slane %v333, 2
  %v738 = vsel %vm699, %v737, %v736
  %v748 = vrot.slane %v536, 1
  %v749 = vsel %vm681, %v555, %v748
  %v750 = vrot.slane %v574, 7
  %v751 = vsel %vm684, %v750, %v749
  %v752 = vrot.slane %v593, 6
  %v753 = vsel %vm687, %v752, %v751
  %v754 = vrot.slane %v612, 5
  %v755 = vsel %vm690, %v754, %v753
  %v756 = vrot.slane %v631, 4
  %v757 = vsel %vm693, %v756, %v755
  %v758 = vrot.slane %v650, 3
  %v759 = vsel %vm696, %v758, %v757
  %v760 = vrot.slane %v669, 2
  %v761 = vsel %vm699, %v760, %v759
  %v763 = vld [vmem:[%s7] sm:$0xff]
  %v764 = vld [vmem:[%s7 + $0x8] sm:$0xff]
  %v765 = vld [vmem:[%s7 + $0x10] sm:$0xff]
  %v766 = vld [vmem:[%s7 + $0x18] sm:$0xff]
  %v767 = vld [vmem:[%s7 + $0x20] sm:$0xff]
  %v768 = vld [vmem:[%s7 + $0x28] sm:$0xff]
  %v769 = vld [vmem:[%s7 + $0x30] sm:$0xff]
  %v770 = vld [vmem:[%s7 + $0x38] sm:$0xff]
  %v771 = vld [vmem:[%s7 + $0x40] sm:$0xff]
  %v772 = vld [vmem:[%s7 + $0x48] sm:$0xff]
  %v773 = vld [vmem:[%s7 + $0x50] sm:$0xff]
  %v774 = vld [vmem:[%s7 + $0x58] sm:$0xff]
  %v775 = vld [vmem:[%s7 + $0x60] sm:$0xff]
  %v776 = vld [vmem:[%s7 + $0x68] sm:$0xff]
  %v777 = vld [vmem:[%s7 + $0x70] sm:$0xff]
  %v778 = vld [vmem:[%s7 + $0x78] sm:$0xff]
  %v779 = vld [vmem:[%s8] sm:$0x1]
  %v781 = vperm.slane %v779, 0
  %783 = vmatpush.msra.mxu0 %v778
  %784 = vmatpush.msra.mxu0 %v777
  %785 = vmatpush.msra.mxu0 %v776
  %786 = vmatpush.msra.mxu0 %v775
  %787 = vmatpush.msra.mxu0 %v774
  %788 = vmatpush.msra.mxu0 %v773
  %789 = vmatpush.msra.mxu0 %v772
  %790 = vmatpush.msra.mxu0 %v771
  %791 = vmatpush.msra.mxu0 %v770
  %792 = vmatpush.msra.mxu0 %v769
  %793 = vmatpush.msra.mxu0 %v768
  %794 = vmatpush.msra.mxu0 %v767
  %795 = vmatpush.msra.mxu0 %v766
  %796 = vmatpush.msra.mxu0 %v765
  %797 = vmatpush.msra.mxu0 %v764
  %798 = vmatpush.msra.mxu0 %v763
  %799 = vmatmul.f32.gmra.mxu0 %v132
  %v800 = vpop.f32.mrf.mxu0
  %v801 = vadd.f32 %v781, %v800
  %802 = vmatmul.f32.gmra.mxu0 %v133
  %v803 = vpop.f32.mrf.mxu0
  %v804 = vadd.f32 %v781, %v803
  %805 = vmatmul.f32.gmra.mxu0 %v134
  %v806 = vpop.f32.mrf.mxu0
  %v807 = vadd.f32 %v781, %v806
  %808 = vmatmul.f32.gmra.mxu0 %v700
  %v809 = vpop.f32.mrf.mxu0
  %v810 = vadd.f32 %v781, %v809
  %811 = vmatmul.f32.gmra.mxu0 %v723
  %v812 = vpop.f32.mrf.mxu0
  %v813 = vadd.f32 %v781, %v812
  %814 = vmatmul.f32.gmra.mxu0 %v738
  %v815 = vpop.f32.mrf.mxu0
  %v816 = vadd.f32 %v781, %v815
  %817 = vmatmul.f32.gmra.mxu0 %v761
  %v818 = vpop.f32.mrf.mxu0
  %v819 = vadd.f32 %v781, %v818
  %820 = vdwg.mxu0
  %821 = vst [vmem:[%s9] sm:$0xff] %v801
  %822 = vst [vmem:[%s9 + $0x8] sm:$0xff] %v804
  %823 = vst [vmem:[%s9 + $0x10] sm:$0xff] %v807
  %824 = vst [vmem:[%s9 + $0x18] sm:$0xff] %v810
  %825 = vst [vmem:[%s9 + $0x20] sm:$0xff] %v813
  %826 = vst [vmem:[%s9 + $0x28] sm:$0xff] %v816
  %827 = vst [vmem:[%s9 + $0x30] sm:$0xff] %v819
  // Predicated region
  $region38: #{model_forward.1} parent=0 // pred_check
    _
  $region39: #{model_forward.1} parent=0 // pred_check_branch
    %829 = sbr.rel (0) target = $region41
  $region40: #{model_forward.1} parent=0 // pred_region
    _
  $region41: #{model_forward.1} parent=0 // pred_fallthru
    _
  // Predicated region
  $region42: #{model_forward.1} parent=0 // pred_check
    _
  $region43: #{model_forward.1} parent=0 // pred_check_branch
    %831 = sbr.rel (0) target = $region45
  $region44: #{model_forward.1} parent=0 // pred_region
    _
  $region45: #{model_forward.1} parent=0 // pred_fallthru
    _

</llo_original>
